<compile_context>
chip_gen: v5e
topology: v5e:2x2
jax: 0.10.0
libtpu: 0.0.40
codegen_flags: <defaults>
</compile_context>

<pallas_src>
import functools

import jax
import jax.numpy as jnp
from jax.experimental import pallas as pl
from jax.experimental.pallas import tpu as pltpu


# ----------------------------------------------------------------------------
# Pallas kernel: fused  relu(x @ W + prior_sum + bias)
# ----------------------------------------------------------------------------
def _bottleneck_kernel(x_ref, p_ref, w_ref, b_ref, o_ref):
    acc = jnp.dot(x_ref[...], w_ref[...], preferred_element_type=jnp.float32)
    acc = acc + p_ref[...] + b_ref[...]          # f32 epilogue: prior + bias
    o_ref[...] = jnp.maximum(acc, 0.0).astype(o_ref.dtype)


def bottleneck_matmul_add_relu(x, prior, w, b, *, tm=512):
    """relu(x @ w + prior + b).

    x:     (M, K) activations (cast to bf16 for the MXU)
    prior: (M, N) f32 additive term (sum of upsampled pyramid priors)
    w:     (K, N) weights (cast to bf16)
    b:     (N,)   f32 bias
    Returns (M, N) f32.
    """
    M, K = x.shape
    K2, N = w.shape
    assert K == K2 and prior.shape == (M, N) and b.shape == (N,)

    tm = min(tm, M)                 # one tile if M is small; else 512-row tiles
    grid_m = pl.cdiv(M, tm)         # partial last tile is masked by Pallas

    x_bf = x.astype(jnp.bfloat16)
    w_bf = w.astype(jnp.bfloat16)
    b2 = b.reshape(1, N).astype(jnp.float32)
    prior = prior.astype(jnp.float32)

    cost = pl.CostEstimate(
        flops=2 * M * K * N,
        transcendentals=0,
        bytes_accessed=(M * K * 2 + K * N * 2 + M * N * 4 + N * 4 + M * N * 4),
    )

    return pl.pallas_call(
        _bottleneck_kernel,
        out_shape=jax.ShapeDtypeStruct((M, N), jnp.float32),
        grid_spec=pltpu.PrefetchScalarGridSpec(
            num_scalar_prefetch=0,
            grid=(grid_m,),
            in_specs=[
                pl.BlockSpec((tm, K), lambda i: (i, 0)),   # pixel tile (bf16)
                pl.BlockSpec((tm, N), lambda i: (i, 0)),   # prior-sum tile (f32)
                pl.BlockSpec((K, N), lambda i: (0, 0)),    # resident weight
                pl.BlockSpec((1, N), lambda i: (0, 0)),    # resident bias
            ],
            out_specs=pl.BlockSpec((tm, N), lambda i: (i, 0)),
        ),
        compiler_params=pltpu.CompilerParams(
            dimension_semantics=("parallel",),             # megacore-shardable M
            vmem_limit_bytes=48 * 1024 * 1024,             # fits v5e/v6e/v7x
        ),
        cost_estimate=cost,
    )(x_bf, prior, w_bf, b2)


# ----------------------------------------------------------------------------
# JAX glue: PyTorch-exact adaptive average pool and bilinear upsample
# (these touch at most sizes**2 <= 36 pixels per batch before upsampling)
# ----------------------------------------------------------------------------
def adaptive_avg_pool_nhwc(x, s):
    """Matches torch.nn.AdaptiveAvgPool2d((s, s)).  x: (B, H, W, C), s: int."""
    B, H, W, C = x.shape
    rows = []
    for i in range(s):
        h0 = (i * H) // s
        h1 = -((-(i + 1) * H) // s)          # ceil((i+1)*H/s)
        cols = []
        for j in range(s):
            w0 = (j * W) // s
            w1 = -((-(j + 1) * W) // s)
            cols.append(jnp.mean(x[:, h0:h1, w0:w1, :], axis=(1, 2)))
        rows.append(jnp.stack(cols, axis=1))
    return jnp.stack(rows, axis=1)           # (B, s, s, C)


def _ac_coords(out_size, in_size):
    """Source coords for bilinear interpolation with align_corners=True."""
    if in_size == 1:
        src = jnp.zeros((out_size,), jnp.float32)
    else:
        src = jnp.arange(out_size, dtype=jnp.float32) * (
            (in_size - 1) / (out_size - 1))
    i0 = jnp.floor(src).astype(jnp.int32)
    i1 = jnp.minimum(i0 + 1, in_size - 1)
    frac = src - i0.astype(jnp.float32)
    return i0, i1, frac


def upsample_bilinear_ac_nhwc(x, H, W):
    """Matches F.upsample(mode='bilinear', align_corners=True). x: (B,s,s,C)."""
    B, sh, sw, C = x.shape
    h0, h1, hf = _ac_coords(H, sh)
    w0, w1, wf = _ac_coords(W, sw)
    xh = (x[:, h0, :, :] * (1.0 - hf)[None, :, None, None]
          + x[:, h1, :, :] * hf[None, :, None, None])           # (B, H, sw, C)
    out = (xh[:, :, w0, :] * (1.0 - wf)[None, None, :, None]
           + xh[:, :, w1, :] * wf[None, None, :, None])          # (B, H, W, C)
    return out


# ----------------------------------------------------------------------------
# PSPModule parameters & forward
# ----------------------------------------------------------------------------
def init_psp_params(key, features, out_features, sizes):
    keys = jax.random.split(key, len(sizes) + 2)
    stage_ws = [
        jax.random.normal(keys[i], (features, features), jnp.float32) * 0.1
        for i in range(len(sizes))
    ]
    k_in = features * (len(sizes) + 1)
    w_bottle = jax.random.normal(keys[-2], (k_in, out_features), jnp.float32) * 0.1
    b_bottle = jax.random.normal(keys[-1], (out_features,), jnp.float32) * 0.1
    return {"stage_ws": stage_ws, "w_bottle": w_bottle, "b_bottle": b_bottle}


@functools.partial(jax.jit, static_argnames=("sizes",))
def psp_forward(feats_nchw, params, *, sizes):
    """feats_nchw: (B, C, H, W) f32 -> (B, out_features, H, W) f32."""
    B, C, H, W = feats_nchw.shape
    x = jnp.transpose(feats_nchw, (0, 2, 3, 1))                  # NHWC

    n_stages = len(sizes)
    w_bottle = params["w_bottle"]                                # (C*(n+1), N)
    b_bottle = params["b_bottle"]                                # (N,)
    N = w_bottle.shape[1]

    # Pad output channels to a lane-dense multiple of 128 via the weights (the
    # extra zero columns cost nothing in the tiny stage matmuls and give
    # unmasked full-lane stores in the Pallas kernel); sliced off at the end.
    N_pad = max(128, pl.cdiv(N, 128) * 128)
    if N_pad != N:
        w_bottle = jnp.pad(w_bottle, ((0, 0), (0, N_pad - N)))
        b_bottle = jnp.pad(b_bottle, (0, N_pad - N))

    # Fold each stage's 1x1 conv with its slice of the bottleneck weight,
    # apply on the pooled s*s maps, upsample the N-channel result, accumulate.
    prior_sum = jnp.zeros((B, H, W, N_pad), jnp.float32)
    for idx, (s, w_stage) in enumerate(zip(sizes, params["stage_ws"])):
        w_comb = w_stage @ w_bottle[idx * C:(idx + 1) * C, :]    # (C, N_pad)
        pooled = adaptive_avg_pool_nhwc(x, s)                    # (B, s, s, C)
        small = jnp.einsum("bhwc,cn->bhwn", pooled, w_comb)      # tiny matmul
        prior_sum = prior_sum + upsample_bilinear_ac_nhwc(small, H, W)

    w_x = w_bottle[n_stages * C:, :]                             # (C, N_pad)

    flat_x = x.reshape(B * H * W, C)
    flat_p = prior_sum.reshape(B * H * W, N_pad)
    out = bottleneck_matmul_add_relu(flat_x, flat_p, w_x, b_bottle)
    out = out.reshape(B, H, W, N_pad)
    if N_pad != N:
        out = out[..., :N]
    return jnp.transpose(out, (0, 3, 1, 2))                      # back to NCHW


if __name__ == "__main__":
    key = jax.random.PRNGKey(0)
    k_x, k_p = jax.random.split(key)

    B, C, H, W = 2, 4, 16, 16
    out_features = 32
    sizes = (1, 2, 3, 6)

    feats = jax.random.normal(k_x, (B, C, H, W), jnp.float32)
    params = init_psp_params(k_p, C, out_features, sizes)

    out = psp_forward(feats, params, sizes=sizes)
    out = jax.block_until_ready(out)
    assert out.shape == (B, out_features, H, W), out.shape
    assert bool(jnp.all(out >= 0.0))  # ReLU output
    print("KERNEL_OK")
</pallas_src>

<mosaic_0001>
module attributes {stable_mosaic.version = 11 : i64} {
  func.func @_bottleneck_kernel(%arg0: i32, %arg1: memref<512x4xbf16, #tpu.memory_space<vmem>>, %arg2: memref<512x128xf32, #tpu.memory_space<vmem>>, %arg3: memref<4x128xbf16, #tpu.memory_space<vmem>>, %arg4: memref<1x128xf32, #tpu.memory_space<vmem>>, %arg5: memref<512x128xf32, #tpu.memory_space<vmem>>) attributes {dimension_semantics = [#tpu.dimension_semantics<parallel>], iteration_bounds = array<i64: 1>, scalar_prefetch = 0 : i64, scratch_operands = 0 : i64, tpu.core_type = #tpu.core_type<tc>, window_params = [{transform_indices = @transform_0, window_bounds = array<i64: 512, 4>}, {transform_indices = @transform_1, window_bounds = array<i64: 512, 128>}, {pipeline_mode = #tpu.pipeline_mode<synchronous>, transform_indices = @transform_2, window_bounds = array<i64: 4, 128>}, {pipeline_mode = #tpu.pipeline_mode<synchronous>, transform_indices = @transform_3, window_bounds = array<i64: 1, 128>}, {transform_indices = @transform_4, window_bounds = array<i64: 512, 128>}]} {
    %c0 = arith.constant 0 : index
    %c0_0 = arith.constant 0 : index
    %0 = vector.load %arg1[%c0, %c0_0] : memref<512x4xbf16, #tpu.memory_space<vmem>>, vector<512x4xbf16>
    %c0_1 = arith.constant 0 : index
    %c0_2 = arith.constant 0 : index
    %1 = vector.load %arg3[%c0_1, %c0_2] : memref<4x128xbf16, #tpu.memory_space<vmem>>, vector<4x128xbf16>
    %cst = arith.constant dense<0.000000e+00> : vector<512x128xf32>
    %2 = tpu.matmul %0, %1, %cst {dimension_numbers = #tpu.dot_dimension_numbers<[1], [0], [0], [1], [0, 0, 1, 1], [], []>} : vector<512x4xbf16>, vector<4x128xbf16>, vector<512x128xf32> -> vector<512x128xf32>
    %c0_3 = arith.constant 0 : index
    %c0_4 = arith.constant 0 : index
    %3 = vector.load %arg2[%c0_3, %c0_4] : memref<512x128xf32, #tpu.memory_space<vmem>>, vector<512x128xf32>
    %4 = arith.addf %2, %3 : vector<512x128xf32>
    %c0_5 = arith.constant 0 : index
    %c0_6 = arith.constant 0 : index
    %5 = vector.load %arg4[%c0_5, %c0_6] : memref<1x128xf32, #tpu.memory_space<vmem>>, vector<1x128xf32>
    %6 = vector.broadcast %5 : vector<1x128xf32> to vector<512x128xf32>
    %7 = arith.addf %4, %6 : vector<512x128xf32>
    %cst_7 = arith.constant 0.000000e+00 : f32
    %8 = vector.broadcast %cst_7 : f32 to vector<512x128xf32>
    %9 = arith.maximumf %7, %8 : vector<512x128xf32>
    %c0_8 = arith.constant 0 : index
    %c0_9 = arith.constant 0 : index
    %10 = vector.load %arg5[%c0_8, %c0_9] : memref<512x128xf32, #tpu.memory_space<vmem>>, vector<512x128xf32>
    tpu.vector_store %arg5[%c0_8, %c0_9], %9 {strides = array<i32>} : memref<512x128xf32, #tpu.memory_space<vmem>>, vector<512x128xf32>,
    return
  }
  func.func @transform_0(%arg0: i32) -> (i32, i32) {
    %c0_i32 = arith.constant 0 : i32
    %c0_i32_0 = arith.constant 0 : i32
    return %arg0, %c0_i32 : i32, i32
  }
  func.func @transform_1(%arg0: i32) -> (i32, i32) {
    %c0_i32 = arith.constant 0 : i32
    %c0_i32_0 = arith.constant 0 : i32
    return %arg0, %c0_i32 : i32, i32
  }
  func.func @transform_2(%arg0: i32) -> (i32, i32) {
    %c0_i32 = arith.constant 0 : i32
    %c0_i32_0 = arith.constant 0 : i32
    %c0_i32_1 = arith.constant 0 : i32
    return %c0_i32, %c0_i32_0 : i32, i32
  }
  func.func @transform_3(%arg0: i32) -> (i32, i32) {
    %c0_i32 = arith.constant 0 : i32
    %c0_i32_0 = arith.constant 0 : i32
    %c0_i32_1 = arith.constant 0 : i32
    return %c0_i32, %c0_i32_0 : i32, i32
  }
  func.func @transform_4(%arg0: i32) -> (i32, i32) {
    %c0_i32 = arith.constant 0 : i32
    %c0_i32_0 = arith.constant 0 : i32
    return %arg0, %c0_i32 : i32, i32
  }
}

</mosaic_0001>

<llo_original>
// kernel: psp_forward.1
$region0: #{psp_forward.1}
  #allocation0 [shape = 'u32[]', space=smem, size = 0x4, offset = 0x4, fixed_abs, tag = 'smem constant byte address 0x4 - core index']
  #allocation1 [shape = 'u32[72,128]{1,0:T(1,128)}', space=vmem, size = 0x9000, scoped, tag = 'internal scratch']
  %s0 = inlined_call_operand.vmem [shape: bf16[512,4], index: 0, kind: input, shape index: {}]
  %s1 = inlined_call_operand.vmem [shape: f32[512,128], index: 1, kind: input, shape index: {}]
  %s2 = inlined_call_operand.vmem [shape: bf16[4,128], index: 2, kind: input, shape index: {}]
  %s3 = inlined_call_operand.vmem [shape: f32[1,128], index: 3, kind: input, shape index: {}]
  %s4 = inlined_call_operand.vmem [shape: f32[512,128], index: 4, kind: output, shape index: {}]
  %s5 = sld [smem:[#allocation0]]
  $region26: #{psp_forward.1} parent=0
    _
  %s7 = ssub.s32 1, %s5
  %s8 = scalar_select 0, %s7, %s5
  // Predicated region
  $region2: #{psp_forward.1} parent=0 // pred_check
    _
  $region3: #{psp_forward.1} parent=0 // pred_check_branch
    %10 = sbr.rel (0) target = $region5
  $region4: #{psp_forward.1} parent=0 // pred_region
    _
  $region5: #{psp_forward.1} parent=0 // pred_fallthru
    _
  // Predicated region
  $region6: #{psp_forward.1} parent=0 // pred_check
    _
  $region7: #{psp_forward.1} parent=0 // pred_check_branch
    %12 = sbr.rel (0) target = $region9
  $region8: #{psp_forward.1} parent=0 // pred_region
    _
  $region9: #{psp_forward.1} parent=0 // pred_fallthru
    _
  // Predicated region
  $region10: #{psp_forward.1} parent=0 // pred_check
    _
  $region11: #{psp_forward.1} parent=0 // pred_check_branch
    %14 = sbr.rel (0) target = $region13
  $region12: #{psp_forward.1} parent=0 // pred_region
    _
  $region13: #{psp_forward.1} parent=0 // pred_fallthru
    _
  // Predicated region
  $region14: #{psp_forward.1} parent=0 // pred_check
    _
  $region15: #{psp_forward.1} parent=0 // pred_check_branch
    %16 = sbr.rel (0) target = $region17
  $region16: #{psp_forward.1} parent=0 // pred_region
    _
  $region17: #{psp_forward.1} parent=0 // pred_fallthru
    _
  %v18 = vld [vmem:[%s0] sm:$0xf]
  %v19 = vld [vmem:[%s0 + $0x4] sm:$0xf]
  %v20 = vld [vmem:[%s0 + $0x8] sm:$0xf]
  %v21 = vld [vmem:[%s0 + $0xc] sm:$0xf]
  %v22 = vld [vmem:[%s0 + $0x10] sm:$0xf]
  %v23 = vld [vmem:[%s0 + $0x14] sm:$0xf]
  %v24 = vld [vmem:[%s0 + $0x18] sm:$0xf]
  %v25 = vld [vmem:[%s0 + $0x1c] sm:$0xf]
  %v26 = vld [vmem:[%s0 + $0x20] sm:$0xf]
  %v27 = vld [vmem:[%s0 + $0x24] sm:$0xf]
  %v28 = vld [vmem:[%s0 + $0x28] sm:$0xf]
  %v29 = vld [vmem:[%s0 + $0x2c] sm:$0xf]
  %v30 = vld [vmem:[%s0 + $0x30] sm:$0xf]
  %v31 = vld [vmem:[%s0 + $0x34] sm:$0xf]
  %v32 = vld [vmem:[%s0 + $0x38] sm:$0xf]
  %v33 = vld [vmem:[%s0 + $0x3c] sm:$0xf]
  %v34 = vld [vmem:[%s0 + $0x40] sm:$0xf]
  %v35 = vld [vmem:[%s0 + $0x44] sm:$0xf]
  %v36 = vld [vmem:[%s0 + $0x48] sm:$0xf]
  %v37 = vld [vmem:[%s0 + $0x4c] sm:$0xf]
  %v38 = vld [vmem:[%s0 + $0x50] sm:$0xf]
  %v39 = vld [vmem:[%s0 + $0x54] sm:$0xf]
  %v40 = vld [vmem:[%s0 + $0x58] sm:$0xf]
  %v41 = vld [vmem:[%s0 + $0x5c] sm:$0xf]
  %v42 = vld [vmem:[%s0 + $0x60] sm:$0xf]
  %v43 = vld [vmem:[%s0 + $0x64] sm:$0xf]
  %v44 = vld [vmem:[%s0 + $0x68] sm:$0xf]
  %v45 = vld [vmem:[%s0 + $0x6c] sm:$0xf]
  %v46 = vld [vmem:[%s0 + $0x70] sm:$0xf]
  %v47 = vld [vmem:[%s0 + $0x74] sm:$0xf]
  %v48 = vld [vmem:[%s0 + $0x78] sm:$0xf]
  %v49 = vld [vmem:[%s0 + $0x7c] sm:$0xf]
  %v50 = vld [vmem:[%s0 + $0x80] sm:$0xf]
  %v51 = vld [vmem:[%s0 + $0x84] sm:$0xf]
  %v52 = vld [vmem:[%s0 + $0x88] sm:$0xf]
  %v53 = vld [vmem:[%s0 + $0x8c] sm:$0xf]
  %v54 = vld [vmem:[%s0 + $0x90] sm:$0xf]
  %v55 = vld [vmem:[%s0 + $0x94] sm:$0xf]
  %v56 = vld [vmem:[%s0 + $0x98] sm:$0xf]
  %v57 = vld [vmem:[%s0 + $0x9c] sm:$0xf]
  %v58 = vld [vmem:[%s0 + $0xa0] sm:$0xf]
  %v59 = vld [vmem:[%s0 + $0xa4] sm:$0xf]
  %v60 = vld [vmem:[%s0 + $0xa8] sm:$0xf]
  %v61 = vld [vmem:[%s0 + $0xac] sm:$0xf]
  %v62 = vld [vmem:[%s0 + $0xb0] sm:$0xf]
  %v63 = vld [vmem:[%s0 + $0xb4] sm:$0xf]
  %v64 = vld [vmem:[%s0 + $0xb8] sm:$0xf]
  %v65 = vld [vmem:[%s0 + $0xbc] sm:$0xf]
  %v66 = vld [vmem:[%s0 + $0xc0] sm:$0xf]
  %v67 = vld [vmem:[%s0 + $0xc4] sm:$0xf]
  %v68 = vld [vmem:[%s0 + $0xc8] sm:$0xf]
  %v69 = vld [vmem:[%s0 + $0xcc] sm:$0xf]
  %v70 = vld [vmem:[%s0 + $0xd0] sm:$0xf]
  %v71 = vld [vmem:[%s0 + $0xd4] sm:$0xf]
  %v72 = vld [vmem:[%s0 + $0xd8] sm:$0xf]
  %v73 = vld [vmem:[%s0 + $0xdc] sm:$0xf]
  %v74 = vld [vmem:[%s0 + $0xe0] sm:$0xf]
  %v75 = vld [vmem:[%s0 + $0xe4] sm:$0xf]
  %v76 = vld [vmem:[%s0 + $0xe8] sm:$0xf]
  %v77 = vld [vmem:[%s0 + $0xec] sm:$0xf]
  %v78 = vld [vmem:[%s0 + $0xf0] sm:$0xf]
  %v79 = vld [vmem:[%s0 + $0xf4] sm:$0xf]
  %v80 = vld [vmem:[%s0 + $0xf8] sm:$0xf]
  %v81 = vld [vmem:[%s0 + $0xfc] sm:$0xf]
  %v82 = vld [vmem:[%s2] sm:$0x3]
  %v83 = vld [vmem:[%s1] sm:$0xff]
  %v84 = vld [vmem:[%s1 + $0x8] sm:$0xff]
  %v85 = vld [vmem:[%s1 + $0x10] sm:$0xff]
  %v86 = vld [vmem:[%s1 + $0x18] sm:$0xff]
  %v87 = vld [vmem:[%s1 + $0x20] sm:$0xff]
  %v88 = vld [vmem:[%s1 + $0x28] sm:$0xff]
  %v89 = vld [vmem:[%s1 + $0x30] sm:$0xff]
  %v90 = vld [vmem:[%s1 + $0x38] sm:$0xff]
  %v91 = vld [vmem:[%s1 + $0x40] sm:$0xff]
  %v92 = vld [vmem:[%s1 + $0x48] sm:$0xff]
  %v93 = vld [vmem:[%s1 + $0x50] sm:$0xff]
  %v94 = vld [vmem:[%s1 + $0x58] sm:$0xff]
  %v95 = vld [vmem:[%s1 + $0x60] sm:$0xff]
  %v96 = vld [vmem:[%s1 + $0x68] sm:$0xff]
  %v97 = vld [vmem:[%s1 + $0x70] sm:$0xff]
  %v98 = vld [vmem:[%s1 + $0x78] sm:$0xff]
  %v99 = vld [vmem:[%s1 + $0x80] sm:$0xff]
  %v100 = vld [vmem:[%s1 + $0x88] sm:$0xff]
  %v101 = vld [vmem:[%s1 + $0x90] sm:$0xff]
  %v102 = vld [vmem:[%s1 + $0x98] sm:$0xff]
  %v103 = vld [vmem:[%s1 + $0xa0] sm:$0xff]
  %v104 = vld [vmem:[%s1 + $0xa8] sm:$0xff]
  %v105 = vld [vmem:[%s1 + $0xb0] sm:$0xff]
  %v106 = vld [vmem:[%s1 + $0xb8] sm:$0xff]
  %v107 = vld [vmem:[%s1 + $0xc0] sm:$0xff]
  %v108 = vld [vmem:[%s1 + $0xc8] sm:$0xff]
  %v109 = vld [vmem:[%s1 + $0xd0] sm:$0xff]
  %v110 = vld [vmem:[%s1 + $0xd8] sm:$0xff]
  %v111 = vld [vmem:[%s1 + $0xe0] sm:$0xff]
  %v112 = vld [vmem:[%s1 + $0xe8] sm:$0xff]
  %v113 = vld [vmem:[%s1 + $0xf0] sm:$0xff]
  %v114 = vld [vmem:[%s1 + $0xf8] sm:$0xff]
  %v115 = vld [vmem:[%s1 + $0x100] sm:$0xff]
  %v116 = vld [vmem:[%s1 + $0x108] sm:$0xff]
  %v117 = vld [vmem:[%s1 + $0x110] sm:$0xff]
  %v118 = vld [vmem:[%s1 + $0x118] sm:$0xff]
  %v119 = vld [vmem:[%s1 + $0x120] sm:$0xff]
  %v120 = vld [vmem:[%s1 + $0x128] sm:$0xff]
  %v121 = vld [vmem:[%s1 + $0x130] sm:$0xff]
  %v122 = vld [vmem:[%s1 + $0x138] sm:$0xff]
  %v123 = vld [vmem:[%s1 + $0x140] sm:$0xff]
  %v124 = vld [vmem:[%s1 + $0x148] sm:$0xff]
  %v125 = vld [vmem:[%s1 + $0x150] sm:$0xff]
  %v126 = vld [vmem:[%s1 + $0x158] sm:$0xff]
  %v127 = vld [vmem:[%s1 + $0x160] sm:$0xff]
  %v128 = vld [vmem:[%s1 + $0x168] sm:$0xff]
  %v129 = vld [vmem:[%s1 + $0x170] sm:$0xff]
  %v130 = vld [vmem:[%s1 + $0x178] sm:$0xff]
  %v131 = vld [vmem:[%s1 + $0x180] sm:$0xff]
  %v132 = vld [vmem:[%s1 + $0x188] sm:$0xff]
  %v133 = vld [vmem:[%s1 + $0x190] sm:$0xff]
  %v134 = vld [vmem:[%s1 + $0x198] sm:$0xff]
  %v135 = vld [vmem:[%s1 + $0x1a0] sm:$0xff]
  %v136 = vld [vmem:[%s1 + $0x1a8] sm:$0xff]
  %v137 = vld [vmem:[%s1 + $0x1b0] sm:$0xff]
  %v138 = vld [vmem:[%s1 + $0x1b8] sm:$0xff]
  %v139 = vld [vmem:[%s1 + $0x1c0] sm:$0xff]
  %v140 = vld [vmem:[%s1 + $0x1c8] sm:$0xff]
  %v141 = vld [vmem:[%s1 + $0x1d0] sm:$0xff]
  %v142 = vld [vmem:[%s1 + $0x1d8] sm:$0xff]
  %v143 = vld [vmem:[%s1 + $0x1e0] sm:$0xff]
  %v144 = vld [vmem:[%s1 + $0x1e8] sm:$0xff]
  %v145 = vld [vmem:[%s1 + $0x1f0] sm:$0xff]
  %v146 = vld [vmem:[%s1 + $0x1f8] sm:$0xff]
  %v211 = vunpack.c.l.b16 %v18
  %v212 = vunpack.c.l.b16 %v19
  %v213 = vunpack.c.l.b16 %v20
  %v214 = vunpack.c.l.b16 %v21
  %v215 = vunpack.c.l.b16 %v22
  %v216 = vunpack.c.l.b16 %v23
  %v217 = vunpack.c.l.b16 %v24
  %v218 = vunpack.c.l.b16 %v25
  %v219 = vunpack.c.l.b16 %v26
  %v220 = vunpack.c.l.b16 %v27
  %v221 = vunpack.c.l.b16 %v28
  %v222 = vunpack.c.l.b16 %v29
  %v223 = vunpack.c.l.b16 %v30
  %v224 = vunpack.c.l.b16 %v31
  %v225 = vunpack.c.l.b16 %v32
  %v226 = vunpack.c.l.b16 %v33
  %v227 = vunpack.c.l.b16 %v34
  %v228 = vunpack.c.l.b16 %v35
  %v229 = vunpack.c.l.b16 %v36
  %v230 = vunpack.c.l.b16 %v37
  %v231 = vunpack.c.l.b16 %v38
  %v232 = vunpack.c.l.b16 %v39
  %v233 = vunpack.c.l.b16 %v40
  %v234 = vunpack.c.l.b16 %v41
  %v235 = vunpack.c.l.b16 %v42
  %v236 = vunpack.c.l.b16 %v43
  %v237 = vunpack.c.l.b16 %v44
  %v238 = vunpack.c.l.b16 %v45
  %v239 = vunpack.c.l.b16 %v46
  %v240 = vunpack.c.l.b16 %v47
  %v241 = vunpack.c.l.b16 %v48
  %v242 = vunpack.c.l.b16 %v49
  %v243 = vunpack.c.l.b16 %v50
  %v244 = vunpack.c.l.b16 %v51
  %v245 = vunpack.c.l.b16 %v52
  %v246 = vunpack.c.l.b16 %v53
  %v247 = vunpack.c.l.b16 %v54
  %v248 = vunpack.c.l.b16 %v55
  %v249 = vunpack.c.l.b16 %v56
  %v250 = vunpack.c.l.b16 %v57
  %v251 = vunpack.c.l.b16 %v58
  %v252 = vunpack.c.l.b16 %v59
  %v253 = vunpack.c.l.b16 %v60
  %v254 = vunpack.c.l.b16 %v61
  %v255 = vunpack.c.l.b16 %v62
  %v256 = vunpack.c.l.b16 %v63
  %v257 = vunpack.c.l.b16 %v64
  %v258 = vunpack.c.l.b16 %v65
  %v259 = vunpack.c.l.b16 %v66
  %v260 = vunpack.c.l.b16 %v67
  %v261 = vunpack.c.l.b16 %v68
  %v262 = vunpack.c.l.b16 %v69
  %v263 = vunpack.c.l.b16 %v70
  %v264 = vunpack.c.l.b16 %v71
  %v265 = vunpack.c.l.b16 %v72
  %v266 = vunpack.c.l.b16 %v73
  %v267 = vunpack.c.l.b16 %v74
  %v268 = vunpack.c.l.b16 %v75
  %v269 = vunpack.c.l.b16 %v76
  %v270 = vunpack.c.l.b16 %v77
  %v271 = vunpack.c.l.b16 %v78
  %v272 = vunpack.c.l.b16 %v79
  %v273 = vunpack.c.l.b16 %v80
  %v274 = vunpack.c.l.b16 %v81
  %v275 = vpack.c.b16 %v212, %v211
  %v276 = vpack.c.b16 %v214, %v213
  %v277 = vpack.c.b16 %v216, %v215
  %v278 = vpack.c.b16 %v218, %v217
  %v279 = vpack.c.b16 %v220, %v219
  %v280 = vpack.c.b16 %v222, %v221
  %v281 = vpack.c.b16 %v224, %v223
  %v282 = vpack.c.b16 %v226, %v225
  %v283 = vpack.c.b16 %v228, %v227
  %v284 = vpack.c.b16 %v230, %v229
  %v285 = vpack.c.b16 %v232, %v231
  %v286 = vpack.c.b16 %v234, %v233
  %v287 = vpack.c.b16 %v236, %v235
  %v288 = vpack.c.b16 %v238, %v237
  %v289 = vpack.c.b16 %v240, %v239
  %v290 = vpack.c.b16 %v242, %v241
  %v291 = vpack.c.b16 %v244, %v243
  %v292 = vpack.c.b16 %v246, %v245
  %v293 = vpack.c.b16 %v248, %v247
  %v294 = vpack.c.b16 %v250, %v249
  %v295 = vpack.c.b16 %v252, %v251
  %v296 = vpack.c.b16 %v254, %v253
  %v297 = vpack.c.b16 %v256, %v255
  %v298 = vpack.c.b16 %v258, %v257
  %v299 = vpack.c.b16 %v260, %v259
  %v300 = vpack.c.b16 %v262, %v261
  %v301 = vpack.c.b16 %v264, %v263
  %v302 = vpack.c.b16 %v266, %v265
  %v303 = vpack.c.b16 %v268, %v267
  %v304 = vpack.c.b16 %v270, %v269
  %v305 = vpack.c.b16 %v272, %v271
  %v306 = vpack.c.b16 %v274, %v273
  %vm307 = vcmask 31744
  %v309 = vsel %vm307, %v275, 0
  %v312 = vsel %vm307, %v276, 0
  %v315 = vsel %vm307, %v277, 0
  %v318 = vsel %vm307, %v278, 0
  %v321 = vsel %vm307, %v279, 0
  %v324 = vsel %vm307, %v280, 0
  %v327 = vsel %vm307, %v281, 0
  %v330 = vsel %vm307, %v282, 0
  %v333 = vsel %vm307, %v283, 0
  %v336 = vsel %vm307, %v284, 0
  %v339 = vsel %vm307, %v285, 0
  %v342 = vsel %vm307, %v286, 0
  %v345 = vsel %vm307, %v287, 0
  %v348 = vsel %vm307, %v288, 0
  %v351 = vsel %vm307, %v289, 0
  %v354 = vsel %vm307, %v290, 0
  %v357 = vsel %vm307, %v291, 0
  %v360 = vsel %vm307, %v292, 0
  %v363 = vsel %vm307, %v293, 0
  %v366 = vsel %vm307, %v294, 0
  %v369 = vsel %vm307, %v295, 0
  %v372 = vsel %vm307, %v296, 0
  %v375 = vsel %vm307, %v297, 0
  %v378 = vsel %vm307, %v298, 0
  %v381 = vsel %vm307, %v299, 0
  %v384 = vsel %vm307, %v300, 0
  %v387 = vsel %vm307, %v301, 0
  %v390 = vsel %vm307, %v302, 0
  %v393 = vsel %vm307, %v303, 0
  %v396 = vsel %vm307, %v304, 0
  %v399 = vsel %vm307, %v305, 0
  %v402 = vsel %vm307, %v306, 0
  %vm404 = vcmask 1041408
  %v406 = vsel %vm404, %v82, 0
  %408 = vmatpush.bf16.msra.mxu0 0
  %409 = vmatpush.bf16.msra.mxu0 0
  %410 = vmatpush.bf16.msra.mxu0 0
  %411 = vmatpush.bf16.msra.mxu0 0
  %412 = vmatpush.bf16.msra.mxu0 0
  %413 = vmatpush.bf16.msra.mxu0 0
  %414 = vmatpush.bf16.msra.mxu0 0
  %415 = vmatpush.bf16.msra.mxu0 %v406
  %416 = vmatmul.bf16.gmra.mxu0 %v309
  %v417 = vpop.f32.mrf.mxu0
  %v418 = vadd.f32 %v83, %v417
  %v419 = vpop.f32.mrf.mxu0
  %v420 = vadd.f32 %v84, %v419
  %421 = vmatmul.bf16.gmra.mxu0 %v312
  %v422 = vpop.f32.mrf.mxu0
  %v423 = vadd.f32 %v85, %v422
  %v424 = vpop.f32.mrf.mxu0
  %v425 = vadd.f32 %v86, %v424
  %426 = vmatmul.bf16.gmra.mxu0 %v315
  %v427 = vpop.f32.mrf.mxu0
  %v428 = vadd.f32 %v87, %v427
  %v429 = vpop.f32.mrf.mxu0
  %v430 = vadd.f32 %v88, %v429
  %431 = vmatmul.bf16.gmra.mxu0 %v318
  %v432 = vpop.f32.mrf.mxu0
  %v433 = vadd.f32 %v89, %v432
  %v434 = vpop.f32.mrf.mxu0
  %v435 = vadd.f32 %v90, %v434
  %436 = vmatmul.bf16.gmra.mxu0 %v321
  %v437 = vpop.f32.mrf.mxu0
  %v438 = vadd.f32 %v91, %v437
  %v439 = vpop.f32.mrf.mxu0
  %v440 = vadd.f32 %v92, %v439
  %441 = vmatmul.bf16.gmra.mxu0 %v324
  %v442 = vpop.f32.mrf.mxu0
  %v443 = vadd.f32 %v93, %v442
  %v444 = vpop.f32.mrf.mxu0
  %v445 = vadd.f32 %v94, %v444
  %446 = vmatmul.bf16.gmra.mxu0 %v327
  %v447 = vpop.f32.mrf.mxu0
  %v448 = vadd.f32 %v95, %v447
  %v449 = vpop.f32.mrf.mxu0
  %v450 = vadd.f32 %v96, %v449
  %451 = vmatmul.bf16.gmra.mxu0 %v330
  %v452 = vpop.f32.mrf.mxu0
  %v453 = vadd.f32 %v97, %v452
  %v454 = vpop.f32.mrf.mxu0
  %v455 = vadd.f32 %v98, %v454
  %456 = vmatmul.bf16.gmra.mxu0 %v333
  %v457 = vpop.f32.mrf.mxu0
  %v458 = vadd.f32 %v99, %v457
  %v459 = vpop.f32.mrf.mxu0
  %v460 = vadd.f32 %v100, %v459
  %461 = vmatmul.bf16.gmra.mxu0 %v336
  %v462 = vpop.f32.mrf.mxu0
  %v463 = vadd.f32 %v101, %v462
  %v464 = vpop.f32.mrf.mxu0
  %v465 = vadd.f32 %v102, %v464
  %466 = vmatmul.bf16.gmra.mxu0 %v339
  %v467 = vpop.f32.mrf.mxu0
  %v468 = vadd.f32 %v103, %v467
  %v469 = vpop.f32.mrf.mxu0
  %v470 = vadd.f32 %v104, %v469
  %471 = vmatmul.bf16.gmra.mxu0 %v342
  %v472 = vpop.f32.mrf.mxu0
  %v473 = vadd.f32 %v105, %v472
  %v474 = vpop.f32.mrf.mxu0
  %v475 = vadd.f32 %v106, %v474
  %476 = vmatmul.bf16.gmra.mxu0 %v345
  %v477 = vpop.f32.mrf.mxu0
  %v478 = vadd.f32 %v107, %v477
  %v479 = vpop.f32.mrf.mxu0
  %v480 = vadd.f32 %v108, %v479
  %481 = vmatmul.bf16.gmra.mxu0 %v348
  %v482 = vpop.f32.mrf.mxu0
  %v483 = vadd.f32 %v109, %v482
  %v484 = vpop.f32.mrf.mxu0
  %v485 = vadd.f32 %v110, %v484
  %486 = vmatmul.bf16.gmra.mxu0 %v351
  %v487 = vpop.f32.mrf.mxu0
  %v488 = vadd.f32 %v111, %v487
  %v489 = vpop.f32.mrf.mxu0
  %v490 = vadd.f32 %v112, %v489
  %491 = vmatmul.bf16.gmra.mxu0 %v354
  %v492 = vpop.f32.mrf.mxu0
  %v493 = vadd.f32 %v113, %v492
  %v494 = vpop.f32.mrf.mxu0
  %v495 = vadd.f32 %v114, %v494
  %496 = vmatmul.bf16.gmra.mxu0 %v357
  %v497 = vpop.f32.mrf.mxu0
  %v498 = vadd.f32 %v115, %v497
  %v499 = vpop.f32.mrf.mxu0
  %v500 = vadd.f32 %v116, %v499
  %501 = vmatmul.bf16.gmra.mxu0 %v360
  %v502 = vpop.f32.mrf.mxu0
  %v503 = vadd.f32 %v117, %v502
  %v504 = vpop.f32.mrf.mxu0
  %v505 = vadd.f32 %v118, %v504
  %506 = vmatmul.bf16.gmra.mxu0 %v363
  %v507 = vpop.f32.mrf.mxu0
  %v508 = vadd.f32 %v119, %v507
  %v509 = vpop.f32.mrf.mxu0
  %v510 = vadd.f32 %v120, %v509
  %511 = vmatmul.bf16.gmra.mxu0 %v366
  %v512 = vpop.f32.mrf.mxu0
  %v513 = vadd.f32 %v121, %v512
  %v514 = vpop.f32.mrf.mxu0
  %v515 = vadd.f32 %v122, %v514
  %516 = vmatmul.bf16.gmra.mxu0 %v369
  %v517 = vpop.f32.mrf.mxu0
  %v518 = vadd.f32 %v123, %v517
  %v519 = vpop.f32.mrf.mxu0
  %v520 = vadd.f32 %v124, %v519
  %521 = vmatmul.bf16.gmra.mxu0 %v372
  %v522 = vpop.f32.mrf.mxu0
  %v523 = vadd.f32 %v125, %v522
  %v524 = vpop.f32.mrf.mxu0
  %v525 = vadd.f32 %v126, %v524
  %526 = vmatmul.bf16.gmra.mxu0 %v375
  %v527 = vpop.f32.mrf.mxu0
  %v528 = vadd.f32 %v127, %v527
  %v529 = vpop.f32.mrf.mxu0
  %v530 = vadd.f32 %v128, %v529
  %531 = vmatmul.bf16.gmra.mxu0 %v378
  %v532 = vpop.f32.mrf.mxu0
  %v533 = vadd.f32 %v129, %v532
  %v534 = vpop.f32.mrf.mxu0
  %v535 = vadd.f32 %v130, %v534
  %536 = vmatmul.bf16.gmra.mxu0 %v381
  %v537 = vpop.f32.mrf.mxu0
  %v538 = vadd.f32 %v131, %v537
  %v539 = vpop.f32.mrf.mxu0
  %v540 = vadd.f32 %v132, %v539
  %541 = vmatmul.bf16.gmra.mxu0 %v384
  %v542 = vpop.f32.mrf.mxu0
  %v543 = vadd.f32 %v133, %v542
  %v544 = vpop.f32.mrf.mxu0
  %v545 = vadd.f32 %v134, %v544
  %546 = vmatmul.bf16.gmra.mxu0 %v387
  %v547 = vpop.f32.mrf.mxu0
  %v548 = vadd.f32 %v135, %v547
  %v549 = vpop.f32.mrf.mxu0
  %v550 = vadd.f32 %v136, %v549
  %551 = vmatmul.bf16.gmra.mxu0 %v390
  %v552 = vpop.f32.mrf.mxu0
  %v553 = vadd.f32 %v137, %v552
  %v554 = vpop.f32.mrf.mxu0
  %v555 = vadd.f32 %v138, %v554
  %556 = vmatmul.bf16.gmra.mxu0 %v393
  %v557 = vpop.f32.mrf.mxu0
  %v558 = vadd.f32 %v139, %v557
  %v559 = vpop.f32.mrf.mxu0
  %v560 = vadd.f32 %v140, %v559
  %561 = vmatmul.bf16.gmra.mxu0 %v396
  %v562 = vpop.f32.mrf.mxu0
  %v563 = vadd.f32 %v141, %v562
  %v564 = vpop.f32.mrf.mxu0
  %v565 = vadd.f32 %v142, %v564
  %566 = vmatmul.bf16.gmra.mxu0 %v399
  %v567 = vpop.f32.mrf.mxu0
  %v568 = vadd.f32 %v143, %v567
  %v569 = vpop.f32.mrf.mxu0
  %v570 = vadd.f32 %v144, %v569
  %571 = vmatmul.bf16.gmra.mxu0 %v402
  %v572 = vpop.f32.mrf.mxu0
  %v573 = vadd.f32 %v145, %v572
  %v574 = vpop.f32.mrf.mxu0
  %v575 = vadd.f32 %v146, %v574
  %576 = vdwg.mxu0
  %v577 = vld [vmem:[%s3] sm:$0x1]
  %v579 = vperm.slane %v577, 0
  %v581 = vadd.f32 %v418, %v579
  %v582 = vadd.f32 %v420, %v579
  %v583 = vadd.f32 %v423, %v579
  %v584 = vadd.f32 %v425, %v579
  %v585 = vadd.f32 %v428, %v579
  %v586 = vadd.f32 %v430, %v579
  %v587 = vadd.f32 %v433, %v579
  %v588 = vadd.f32 %v435, %v579
  %v589 = vadd.f32 %v438, %v579
  %v590 = vadd.f32 %v440, %v579
  %v591 = vadd.f32 %v443, %v579
  %v592 = vadd.f32 %v445, %v579
  %v593 = vadd.f32 %v448, %v579
  %v594 = vadd.f32 %v450, %v579
  %v595 = vadd.f32 %v453, %v579
  %v596 = vadd.f32 %v455, %v579
  %v597 = vadd.f32 %v458, %v579
  %v598 = vadd.f32 %v460, %v579
  %v599 = vadd.f32 %v463, %v579
  %v600 = vadd.f32 %v465, %v579
  %v601 = vadd.f32 %v468, %v579
  %v602 = vadd.f32 %v470, %v579
  %v603 = vadd.f32 %v473, %v579
  %v604 = vadd.f32 %v475, %v579
  %v605 = vadd.f32 %v478, %v579
  %v606 = vadd.f32 %v480, %v579
  %v607 = vadd.f32 %v483, %v579
  %v608 = vadd.f32 %v485, %v579
  %v609 = vadd.f32 %v488, %v579
  %v610 = vadd.f32 %v490, %v579
  %v611 = vadd.f32 %v493, %v579
  %v612 = vadd.f32 %v495, %v579
  %v613 = vadd.f32 %v498, %v579
  %v614 = vadd.f32 %v500, %v579
  %v615 = vadd.f32 %v503, %v579
  %v616 = vadd.f32 %v505, %v579
  %v617 = vadd.f32 %v508, %v579
  %v618 = vadd.f32 %v510, %v579
  %v619 = vadd.f32 %v513, %v579
  %v620 = vadd.f32 %v515, %v579
  %v621 = vadd.f32 %v518, %v579
  %v622 = vadd.f32 %v520, %v579
  %v623 = vadd.f32 %v523, %v579
  %v624 = vadd.f32 %v525, %v579
  %v625 = vadd.f32 %v528, %v579
  %v626 = vadd.f32 %v530, %v579
  %v627 = vadd.f32 %v533, %v579
  %v628 = vadd.f32 %v535, %v579
  %v629 = vadd.f32 %v538, %v579
  %v630 = vadd.f32 %v540, %v579
  %v631 = vadd.f32 %v543, %v579
  %v632 = vadd.f32 %v545, %v579
  %v633 = vadd.f32 %v548, %v579
  %v634 = vadd.f32 %v550, %v579
  %v635 = vadd.f32 %v553, %v579
  %v636 = vadd.f32 %v555, %v579
  %v637 = vadd.f32 %v558, %v579
  %v638 = vadd.f32 %v560, %v579
  %v639 = vadd.f32 %v563, %v579
  %v640 = vadd.f32 %v565, %v579
  %v641 = vadd.f32 %v568, %v579
  %v642 = vadd.f32 %v570, %v579
  %v643 = vadd.f32 %v573, %v579
  %v644 = vadd.f32 %v575, %v579
  %v645 = vmax.f32 %v581, 0.0
  %v646 = vmax.f32 %v582, 0.0
  %v647 = vmax.f32 %v583, 0.0
  %v648 = vmax.f32 %v584, 0.0
  %v649 = vmax.f32 %v585, 0.0
  %v650 = vmax.f32 %v586, 0.0
  %v651 = vmax.f32 %v587, 0.0
  %v652 = vmax.f32 %v588, 0.0
  %v653 = vmax.f32 %v589, 0.0
  %v654 = vmax.f32 %v590, 0.0
  %v655 = vmax.f32 %v591, 0.0
  %v656 = vmax.f32 %v592, 0.0
  %v657 = vmax.f32 %v593, 0.0
  %v658 = vmax.f32 %v594, 0.0
  %v659 = vmax.f32 %v595, 0.0
  %v660 = vmax.f32 %v596, 0.0
  %v661 = vmax.f32 %v597, 0.0
  %v662 = vmax.f32 %v598, 0.0
  %v663 = vmax.f32 %v599, 0.0
  %v664 = vmax.f32 %v600, 0.0
  %v665 = vmax.f32 %v601, 0.0
  %v666 = vmax.f32 %v602, 0.0
  %v667 = vmax.f32 %v603, 0.0
  %v668 = vmax.f32 %v604, 0.0
  %v669 = vmax.f32 %v605, 0.0
  %v670 = vmax.f32 %v606, 0.0
  %v671 = vmax.f32 %v607, 0.0
  %v672 = vmax.f32 %v608, 0.0
  %v673 = vmax.f32 %v609, 0.0
  %v674 = vmax.f32 %v610, 0.0
  %v675 = vmax.f32 %v611, 0.0
  %v676 = vmax.f32 %v612, 0.0
  %v677 = vmax.f32 %v613, 0.0
  %v678 = vmax.f32 %v614, 0.0
  %v679 = vmax.f32 %v615, 0.0
  %v680 = vmax.f32 %v616, 0.0
  %v681 = vmax.f32 %v617, 0.0
  %v682 = vmax.f32 %v618, 0.0
  %v683 = vmax.f32 %v619, 0.0
  %v684 = vmax.f32 %v620, 0.0
  %v685 = vmax.f32 %v621, 0.0
  %v686 = vmax.f32 %v622, 0.0
  %v687 = vmax.f32 %v623, 0.0
  %v688 = vmax.f32 %v624, 0.0
  %v689 = vmax.f32 %v625, 0.0
  %v690 = vmax.f32 %v626, 0.0
  %v691 = vmax.f32 %v627, 0.0
  %v692 = vmax.f32 %v628, 0.0
  %v693 = vmax.f32 %v629, 0.0
  %v694 = vmax.f32 %v630, 0.0
  %v695 = vmax.f32 %v631, 0.0
  %v696 = vmax.f32 %v632, 0.0
  %v697 = vmax.f32 %v633, 0.0
  %v698 = vmax.f32 %v634, 0.0
  %v699 = vmax.f32 %v635, 0.0
  %v700 = vmax.f32 %v636, 0.0
  %v701 = vmax.f32 %v637, 0.0
  %v702 = vmax.f32 %v638, 0.0
  %v703 = vmax.f32 %v639, 0.0
  %v704 = vmax.f32 %v640, 0.0
  %v705 = vmax.f32 %v641, 0.0
  %v706 = vmax.f32 %v642, 0.0
  %v707 = vmax.f32 %v643, 0.0
  %v708 = vmax.f32 %v644, 0.0
  %709 = vst [vmem:[%s4] sm:$0xff] %v645
  %710 = vst [vmem:[%s4 + $0x8] sm:$0xff] %v646
  %711 = vst [vmem:[%s4 + $0x10] sm:$0xff] %v647
  %712 = vst [vmem:[%s4 + $0x18] sm:$0xff] %v648
  %713 = vst [vmem:[%s4 + $0x20] sm:$0xff] %v649
  %714 = vst [vmem:[%s4 + $0x28] sm:$0xff] %v650
  %715 = vst [vmem:[%s4 + $0x30] sm:$0xff] %v651
  %716 = vst [vmem:[%s4 + $0x38] sm:$0xff] %v652
  %717 = vst [vmem:[%s4 + $0x40] sm:$0xff] %v653
  %718 = vst [vmem:[%s4 + $0x48] sm:$0xff] %v654
  %719 = vst [vmem:[%s4 + $0x50] sm:$0xff] %v655
  %720 = vst [vmem:[%s4 + $0x58] sm:$0xff] %v656
  %721 = vst [vmem:[%s4 + $0x60] sm:$0xff] %v657
  %722 = vst [vmem:[%s4 + $0x68] sm:$0xff] %v658
  %723 = vst [vmem:[%s4 + $0x70] sm:$0xff] %v659
  %724 = vst [vmem:[%s4 + $0x78] sm:$0xff] %v660
  %725 = vst [vmem:[%s4 + $0x80] sm:$0xff] %v661
  %726 = vst [vmem:[%s4 + $0x88] sm:$0xff] %v662
  %727 = vst [vmem:[%s4 + $0x90] sm:$0xff] %v663
  %728 = vst [vmem:[%s4 + $0x98] sm:$0xff] %v664
  %729 = vst [vmem:[%s4 + $0xa0] sm:$0xff] %v665
  %730 = vst [vmem:[%s4 + $0xa8] sm:$0xff] %v666
  %731 = vst [vmem:[%s4 + $0xb0] sm:$0xff] %v667
  %732 = vst [vmem:[%s4 + $0xb8] sm:$0xff] %v668
  %733 = vst [vmem:[%s4 + $0xc0] sm:$0xff] %v669
  %734 = vst [vmem:[%s4 + $0xc8] sm:$0xff] %v670
  %735 = vst [vmem:[%s4 + $0xd0] sm:$0xff] %v671
  %736 = vst [vmem:[%s4 + $0xd8] sm:$0xff] %v672
  %737 = vst [vmem:[%s4 + $0xe0] sm:$0xff] %v673
  %738 = vst [vmem:[%s4 + $0xe8] sm:$0xff] %v674
  %739 = vst [vmem:[%s4 + $0xf0] sm:$0xff] %v675
  %740 = vst [vmem:[%s4 + $0xf8] sm:$0xff] %v676
  %741 = vst [vmem:[%s4 + $0x100] sm:$0xff] %v677
  %742 = vst [vmem:[%s4 + $0x108] sm:$0xff] %v678
  %743 = vst [vmem:[%s4 + $0x110] sm:$0xff] %v679
  %744 = vst [vmem:[%s4 + $0x118] sm:$0xff] %v680
  %745 = vst [vmem:[%s4 + $0x120] sm:$0xff] %v681
  %746 = vst [vmem:[%s4 + $0x128] sm:$0xff] %v682
  %747 = vst [vmem:[%s4 + $0x130] sm:$0xff] %v683
  %748 = vst [vmem:[%s4 + $0x138] sm:$0xff] %v684
  %749 = vst [vmem:[%s4 + $0x140] sm:$0xff] %v685
  %750 = vst [vmem:[%s4 + $0x148] sm:$0xff] %v686
  %751 = vst [vmem:[%s4 + $0x150] sm:$0xff] %v687
  %752 = vst [vmem:[%s4 + $0x158] sm:$0xff] %v688
  %753 = vst [vmem:[%s4 + $0x160] sm:$0xff] %v689
  %754 = vst [vmem:[%s4 + $0x168] sm:$0xff] %v690
  %755 = vst [vmem:[%s4 + $0x170] sm:$0xff] %v691
  %756 = vst [vmem:[%s4 + $0x178] sm:$0xff] %v692
  %757 = vst [vmem:[%s4 + $0x180] sm:$0xff] %v693
  %758 = vst [vmem:[%s4 + $0x188] sm:$0xff] %v694
  %759 = vst [vmem:[%s4 + $0x190] sm:$0xff] %v695
  %760 = vst [vmem:[%s4 + $0x198] sm:$0xff] %v696
  %761 = vst [vmem:[%s4 + $0x1a0] sm:$0xff] %v697
  %762 = vst [vmem:[%s4 + $0x1a8] sm:$0xff] %v698
  %763 = vst [vmem:[%s4 + $0x1b0] sm:$0xff] %v699
  %764 = vst [vmem:[%s4 + $0x1b8] sm:$0xff] %v700
  %765 = vst [vmem:[%s4 + $0x1c0] sm:$0xff] %v701
  %766 = vst [vmem:[%s4 + $0x1c8] sm:$0xff] %v702
  %767 = vst [vmem:[%s4 + $0x1d0] sm:$0xff] %v703
  %768 = vst [vmem:[%s4 + $0x1d8] sm:$0xff] %v704
  %769 = vst [vmem:[%s4 + $0x1e0] sm:$0xff] %v705
  %770 = vst [vmem:[%s4 + $0x1e8] sm:$0xff] %v706
  %771 = vst [vmem:[%s4 + $0x1f0] sm:$0xff] %v707
  %772 = vst [vmem:[%s4 + $0x1f8] sm:$0xff] %v708
  // Predicated region
  $region18: #{psp_forward.1} parent=0 // pred_check
    _
  $region19: #{psp_forward.1} parent=0 // pred_check_branch
    %774 = sbr.rel (0) target = $region21
  $region20: #{psp_forward.1} parent=0 // pred_region
    _
  $region21: #{psp_forward.1} parent=0 // pred_fallthru
    _
  // Predicated region
  $region22: #{psp_forward.1} parent=0 // pred_check
    _
  $region23: #{psp_forward.1} parent=0 // pred_check_branch
    %776 = sbr.rel (0) target = $region25
  $region24: #{psp_forward.1} parent=0 // pred_region
    _
  $region25: #{psp_forward.1} parent=0 // pred_fallthru
    _

</llo_original>
